<compile_context>
chip_gen: v5e
topology: v5e:2x2
jax: 0.10.0
libtpu: 0.0.40
codegen_flags: <defaults>
</compile_context>

<pallas_src>
import functools

import jax
import jax.numpy as jnp
from jax.experimental import pallas as pl
from jax.experimental.pallas import tpu as pltpu


def _round_up(x, m):
    return ((x + m - 1) // m) * m


def _patch_linear_kernel(x_ref, w_ref, b_ref, o_ref):
    # x_ref: (TM, Kp)  w_ref: (Kp, Ep)  (compute dtype)   b_ref: (1, Ep) f32
    # o_ref: (TM, Ep)  (final dtype)
    acc = jnp.dot(x_ref[...], w_ref[...], preferred_element_type=jnp.float32)
    o_ref[...] = (acc + b_ref[...]).astype(o_ref.dtype)


def patch_embedding_forward(x, weight, bias, patch_size, *, tm=1024,
                            use_bf16=True, out_dtype=None, weight_t=None,
                            allow_input_fusion=True):
    """x: [B, C, H, W] (NCHW). weight: [E, K] (torch nn.Linear layout). bias: [E].

    weight_t: optional pre-transposed (K, E) weight to skip the per-call transpose.
    """
    B, C, H, W = x.shape
    E, K = weight.shape
    ps = patch_size
    assert H % ps == 0 and W % ps == 0
    h, w = H // ps, W // ps
    assert K == ps * ps * C
    M = B * h * w

    out_dtype = x.dtype if out_dtype is None else out_dtype
    compute_dtype = jnp.bfloat16 if use_bf16 else x.dtype

    # ---- host-side glue (fusible producer of the patches operand) ----------
    # Cast BEFORE the rearrange so the transpose/pad pass moves half the bytes.
    xc = x.astype(compute_dtype)
    xp = xc.reshape(B, C, h, ps, w, ps)              # b c h s1 w s2
    xp = jnp.transpose(xp, (0, 2, 4, 3, 5, 1))       # b h w s1 s2 c
    patches = xp.reshape(M, K)                       # (M, K), c fastest in K

    # Lane-dense last dims (multiples of 128); 16-row alignment for bf16 packing.
    K_pad = _round_up(K, 128)
    E_pad = _round_up(E, 128)
    M16 = _round_up(M, 16)

    # Pick TM so that (a) no ragged last tile, (b) >=2 grid steps when M allows
    # (keeps both TensorCores busy on v7x).
    if M16 >= tm:
        TM = tm
    elif M16 >= 32:
        TM = _round_up(pl.cdiv(M16, 2), 16)
    else:
        TM = M16
    grid_m = pl.cdiv(M16, TM)
    M_pad = grid_m * TM

    if (M_pad - M) or (K_pad - K):
        patches = jnp.pad(patches, ((0, M_pad - M), (0, K_pad - K)))

    if weight_t is None:
        weight_t = weight.astype(compute_dtype).T    # (K, E), cast before transpose
    w_p = weight_t.astype(compute_dtype)
    if (K_pad - K) or (E_pad - E):
        w_p = jnp.pad(w_p, ((0, K_pad - K), (0, E_pad - E)))

    b_p = bias.astype(jnp.float32)
    if E_pad - E:
        b_p = jnp.pad(b_p, (0, E_pad - E))
    b_p = b_p.reshape(1, E_pad)

    # ---- VMEM budget / scheduler hints --------------------------------------
    in_item = jnp.dtype(compute_dtype).itemsize
    out_item = jnp.dtype(out_dtype).itemsize
    vmem_needed = (2 * TM * K_pad * in_item          # double-buffered patch tiles
                   + K_pad * E_pad * in_item         # weight (single-buffered)
                   + E_pad * 4                       # bias (single-buffered)
                   + 2 * TM * E_pad * out_item)      # double-buffered output tiles
    vmem_limit = int(min(64 * 2**20, max(16 * 2**20, 2 * vmem_needed)))

    cost = pl.CostEstimate(
        flops=2 * M_pad * K_pad * E_pad,
        bytes_accessed=(M_pad * K_pad * in_item      # patches in
                        + K_pad * E_pad * in_item    # weight in
                        + E_pad * 4                  # bias in
                        + M_pad * E_pad * out_item), # output out
        transcendentals=0,
    )

    compiler_params = pltpu.CompilerParams(
        dimension_semantics=("parallel",),
        vmem_limit_bytes=vmem_limit,
        allow_input_fusion=[True, False, False] if allow_input_fusion else None,
    )

    out_flat = pl.pallas_call(
        _patch_linear_kernel,
        out_shape=jax.ShapeDtypeStruct((M_pad, E_pad), out_dtype),
        grid_spec=pltpu.PrefetchScalarGridSpec(
            num_scalar_prefetch=0,
            grid=(grid_m,),
            in_specs=[
                # patch rows, tiled over M (double-buffered by default)
                pl.BlockSpec((TM, K_pad), lambda i: (i, 0)),
                # weight: constant block index -> DMA once, single-buffered
                pl.BlockSpec((K_pad, E_pad), lambda i: (0, 0),
                             pipeline_mode=pl.Buffered(1)),
                # bias: constant block index -> DMA once, single-buffered
                pl.BlockSpec((1, E_pad), lambda i: (0, 0),
                             pipeline_mode=pl.Buffered(1)),
            ],
            out_specs=pl.BlockSpec((TM, E_pad), lambda i: (i, 0)),
        ),
        compiler_params=compiler_params,
        cost_estimate=cost,
    )(patches, w_p, b_p)

    # Strip padding only if any was added (avoids an extra M x E copy otherwise).
    out = out_flat
    if M_pad != M or E_pad != E:
        out = out[:M, :E]
    return out.reshape(B, h * w, E)


if __name__ == "__main__":
    # Small shapes consistent with the module (IMAGE mode, Linear projection).
    B, C, H, W = 2, 4, 16, 16
    patch_size = 8
    emb_size = 32
    K = patch_size * patch_size * C          # 256

    key = jax.random.PRNGKey(0)
    kx, kw, kb = jax.random.split(key, 3)

    x = jax.random.normal(kx, (B, C, H, W), dtype=jnp.float32)
    # nn.Linear-style deterministic init: U(-1/sqrt(K), 1/sqrt(K))
    bound = 1.0 / jnp.sqrt(jnp.float32(K))
    weight = jax.random.uniform(kw, (emb_size, K), jnp.float32, -bound, bound)
    bias = jax.random.uniform(kb, (emb_size,), jnp.float32, -bound, bound)

    fwd = jax.jit(functools.partial(patch_embedding_forward, patch_size=patch_size))
    out = jax.block_until_ready(fwd(x, weight, bias))

    # Reference check in plain JAX f32 (same rearrange + linear).
    xp = x.reshape(B, C, H // patch_size, patch_size, W // patch_size, patch_size)
    xp = jnp.transpose(xp, (0, 2, 4, 3, 5, 1)).reshape(B, -1, K)
    ref = xp @ weight.T + bias
    assert out.shape == (B, (H // patch_size) * (W // patch_size), emb_size)
    assert out.dtype == x.dtype
    # bf16 MXU inputs with f32 accumulation -> loosened tolerance vs. f32 reference.
    err = float(jnp.max(jnp.abs(out.astype(jnp.float32) - ref)))
    assert err < 2e-2, err

    print("KERNEL_OK")
</pallas_src>

<mosaic_0001>
module attributes {stable_mosaic.version = 11 : i64} {
  func.func @_patch_linear_kernel(%arg0: i32, %arg1: memref<16x256xbf16, #tpu.memory_space<vmem>>, %arg2: memref<256x128xbf16, #tpu.memory_space<vmem>>, %arg3: memref<1x128xf32, #tpu.memory_space<vmem>>, %arg4: memref<16x128xf32, #tpu.memory_space<vmem>>) attributes {dimension_semantics = [#tpu.dimension_semantics<parallel>], iteration_bounds = array<i64: 1>, scalar_prefetch = 0 : i64, scratch_operands = 0 : i64, tpu.core_type = #tpu.core_type<tc>, window_params = [{transform_indices = @transform_0, window_bounds = array<i64: 16, 256>}, {pipeline_mode = #tpu.pipeline_mode<synchronous>, transform_indices = @transform_1, window_bounds = array<i64: 256, 128>}, {pipeline_mode = #tpu.pipeline_mode<synchronous>, transform_indices = @transform_2, window_bounds = array<i64: 1, 128>}, {transform_indices = @transform_3, window_bounds = array<i64: 16, 128>}]} {
    %c0 = arith.constant 0 : index
    %c0_0 = arith.constant 0 : index
    %0 = vector.load %arg1[%c0, %c0_0] : memref<16x256xbf16, #tpu.memory_space<vmem>>, vector<16x256xbf16>
    %c0_1 = arith.constant 0 : index
    %c0_2 = arith.constant 0 : index
    %1 = vector.load %arg2[%c0_1, %c0_2] : memref<256x128xbf16, #tpu.memory_space<vmem>>, vector<256x128xbf16>
    %cst = arith.constant dense<0.000000e+00> : vector<16x128xf32>
    %2 = tpu.matmul %0, %1, %cst {dimension_numbers = #tpu.dot_dimension_numbers<[1], [0], [0], [1], [0, 0, 1, 1], [], []>} : vector<16x256xbf16>, vector<256x128xbf16>, vector<16x128xf32> -> vector<16x128xf32>
    %c0_3 = arith.constant 0 : index
    %c0_4 = arith.constant 0 : index
    %3 = vector.load %arg3[%c0_3, %c0_4] : memref<1x128xf32, #tpu.memory_space<vmem>>, vector<1x128xf32>
    %4 = vector.broadcast %3 : vector<1x128xf32> to vector<16x128xf32>
    %5 = arith.addf %2, %4 : vector<16x128xf32>
    %c0_5 = arith.constant 0 : index
    %c0_6 = arith.constant 0 : index
    %6 = vector.load %arg4[%c0_5, %c0_6] : memref<16x128xf32, #tpu.memory_space<vmem>>, vector<16x128xf32>
    tpu.vector_store %arg4[%c0_5, %c0_6], %5 {strides = array<i32>} : memref<16x128xf32, #tpu.memory_space<vmem>>, vector<16x128xf32>,
    return
  }
  func.func @transform_0(%arg0: i32) -> (i32, i32) {
    %c0_i32 = arith.constant 0 : i32
    %c0_i32_0 = arith.constant 0 : i32
    return %arg0, %c0_i32 : i32, i32
  }
  func.func @transform_1(%arg0: i32) -> (i32, i32) {
    %c0_i32 = arith.constant 0 : i32
    %c0_i32_0 = arith.constant 0 : i32
    %c0_i32_1 = arith.constant 0 : i32
    return %c0_i32, %c0_i32_0 : i32, i32
  }
  func.func @transform_2(%arg0: i32) -> (i32, i32) {
    %c0_i32 = arith.constant 0 : i32
    %c0_i32_0 = arith.constant 0 : i32
    %c0_i32_1 = arith.constant 0 : i32
    return %c0_i32, %c0_i32_0 : i32, i32
  }
  func.func @transform_3(%arg0: i32) -> (i32, i32) {
    %c0_i32 = arith.constant 0 : i32
    %c0_i32_0 = arith.constant 0 : i32
    return %arg0, %c0_i32 : i32, i32
  }
}

</mosaic_0001>

<llo_original>
// kernel: patch_embedding_forward.2
$region0: #{patch_embedding_forward.2}
  #allocation0 [shape = 'u32[]', space=smem, size = 0x4, offset = 0x4, fixed_abs, tag = 'smem constant byte address 0x4 - core index']
  #allocation1 [shape = 'u32[72,128]{1,0:T(1,128)}', space=vmem, size = 0x9000, scoped, tag = 'internal scratch']
  #allocation2 [shape = 'u32[2048]{0}', space=vmem, size = 0x2000, scoped, tag = 'scoped memory for patch_embedding_forward.2']
  #allocation3 [shape = 'u32[2048]{0}', space=vmem, size = 0x2000, scoped, tag = 'scoped memory for patch_embedding_forward.2']
  #allocation4 [shape = 'u32[2048]{0}', space=vmem, size = 0x2000, scoped, tag = 'scoped memory for patch_embedding_forward.2']
  #allocation5 [shape = 'u32[2048]{0}', space=vmem, size = 0x2000, scoped, tag = 'scoped memory for patch_embedding_forward.2']
  #allocation6 [shape = 'u32[2048]{0}', space=vmem, size = 0x2000, scoped, tag = 'scoped memory for patch_embedding_forward.2']
  %s0 = inlined_call_operand.vmem [shape: bf16[256,128], index: 0, kind: input, shape index: {}]
  %s1 = inlined_call_operand.vmem [shape: f32[1,128], index: 1, kind: input, shape index: {}]
  %s2 = inlined_call_operand.vmem [shape: bf16[8,256], index: 2, kind: input, shape index: {}]
  %s3 = inlined_call_operand.<no memory space> [shape: bf16[], index: 3, kind: input, shape index: {}]
  %s4 = inlined_call_operand.vmem [shape: f32[16,128], index: 4, kind: output, shape index: {}]
  %s5 = sld [smem:[#allocation0]]
  $region22: #{patch_embedding_forward.2} parent=0
    _
  %s7 = ssub.s32 1, %s5
  %s8 = scalar_select 0, %s7, %s5
  %v9 = vstv %s3
  %v10 = vunpack.i.l.bf16 %v9
  %v12 = vunpack.i.h.bf16 %v9
  $region1: #{patch_embedding_forward.2} parent=0
    #allocation7 [shape = 'u8[8192]{0}', space=vmem, size = 0x2000, dematerialized = true, scoped, tag = 'FusionAdapter Buffer %fusion.1 = bf16[16,256]{1,0:T(8,128)(2,1)} fusion(%param_2.1, %param_3), kind=kLoop, calls=%fused_computation.1.clone, metadata={op_name="jit(patch_embedding_forward)/jit(_pad)/pad" stack_frame_id=11}']
    // Predicated region
    $region2: #{patch_embedding_forward.2} parent=1 // pred_check
      _
    $region3: #{patch_embedding_forward.2} parent=1 // pred_check_branch
      %15 = sbr.rel (0) target = $region5
    $region4: #{patch_embedding_forward.2} parent=1 // pred_region
      _
    $region5: #{patch_embedding_forward.2} parent=1 // pred_fallthru
      _
    // Predicated region
    $region6: #{patch_embedding_forward.2} parent=1 // pred_check
      _
    $region7: #{patch_embedding_forward.2} parent=1 // pred_check_branch
      %17 = sbr.rel (0) target = $region9
    $region8: #{patch_embedding_forward.2} parent=1 // pred_region
      _
    $region9: #{patch_embedding_forward.2} parent=1 // pred_fallthru
      _
    // Predicated region
    $region10: #{patch_embedding_forward.2} parent=1 // pred_check
      _
    $region11: #{patch_embedding_forward.2} parent=1 // pred_check_branch
      %19 = sbr.rel (0) target = $region13
    $region12: #{patch_embedding_forward.2} parent=1 // pred_region
      _
    $region13: #{patch_embedding_forward.2} parent=1 // pred_fallthru
      _
    %s21 = sor.u32 255, 127
    %s22 = sand.u32 %s21, 85
    %s23 = sshrl.u32 %s22, 1
    %s24 = sor.u32 %s22, %s23
    %s25 = sand.u32 51, %s24
    %s26 = sshrl.u32 %s25, 2
    %s27 = sor.u32 %s25, %s26
    %s28 = sand.u32 15, %s27
    %v29 = vld [vmem:[%s2] sm:%s28]
    %v30 = vunpack.c.l.bf16 %v29
    %v31 = vunpack.c.h.bf16 %v29
    %v32 = vpack.c.bf16 0.0, %v30
    %s34 = ssub.s32 16, 1
    %35 = vst [vmem:[#allocation7] sm:%s34] %v32
    %s36 = scalar_lea.vmem %s2, 4
    %s38 = sor.u32 255, 127
    %s39 = sand.u32 %s38, 85
    %s40 = sshrl.u32 %s39, 1
    %s41 = sor.u32 %s39, %s40
    %s42 = sand.u32 51, %s41
    %s43 = sshrl.u32 %s42, 2
    %s44 = sor.u32 %s42, %s43
    %s45 = sand.u32 15, %s44
    %v46 = vld [vmem:[%s36] sm:%s45]
    %v47 = vunpack.c.l.bf16 %v46
    %v48 = vunpack.c.h.bf16 %v46
    %s49 = scalar_lea.vmem [#allocation7], 4
    %v50 = vpack.c.bf16 0.0, %v47
    %s52 = ssub.s32 16, 1
    %53 = vst [vmem:[%s49] sm:%s52] %v50
    %s54 = scalar_lea.vmem [#allocation7], 8
    %v55 = vpack.c.bf16 0.0, %v10
    %s57 = ssub.s32 16, 1
    %58 = vst [vmem:[%s54] sm:%s57] %v55
    %s59 = scalar_lea.vmem [#allocation7], 12
    %v60 = vpack.c.bf16 0.0, %v10
    %s62 = ssub.s32 16, 1
    %63 = vst [vmem:[%s59] sm:%s62] %v60
    %v64 = vld [vmem:[#allocation7] sm:$0xff]
    %v65 = vld [vmem:[#allocation7 + $0x8] sm:$0xff]
    %v66 = vld [vmem:[%s0] sm:$0xf]
    %v67 = vld [vmem:[%s0 + $0x4] sm:$0xf]
    %v68 = vld [vmem:[%s0 + $0x8] sm:$0xf]
    %v69 = vld [vmem:[%s0 + $0xc] sm:$0xf]
    %v70 = vld [vmem:[%s0 + $0x10] sm:$0xf]
    %v71 = vld [vmem:[%s0 + $0x14] sm:$0xf]
    %v72 = vld [vmem:[%s0 + $0x18] sm:$0xf]
    %v73 = vld [vmem:[%s0 + $0x1c] sm:$0xf]
    %v74 = vld [vmem:[%s0 + $0x20] sm:$0xf]
    %v75 = vld [vmem:[%s0 + $0x24] sm:$0xf]
    %v76 = vld [vmem:[%s0 + $0x28] sm:$0xf]
    %v77 = vld [vmem:[%s0 + $0x2c] sm:$0xf]
    %v78 = vld [vmem:[%s0 + $0x30] sm:$0xf]
    %v79 = vld [vmem:[%s0 + $0x34] sm:$0xf]
    %v80 = vld [vmem:[%s0 + $0x38] sm:$0xf]
    %v81 = vld [vmem:[%s0 + $0x3c] sm:$0xf]
    %v82 = vld [vmem:[%s0 + $0x40] sm:$0xf]
    %v83 = vld [vmem:[%s0 + $0x44] sm:$0xf]
    %v84 = vld [vmem:[%s0 + $0x48] sm:$0xf]
    %v85 = vld [vmem:[%s0 + $0x4c] sm:$0xf]
    %v86 = vld [vmem:[%s0 + $0x50] sm:$0xf]
    %v87 = vld [vmem:[%s0 + $0x54] sm:$0xf]
    %v88 = vld [vmem:[%s0 + $0x58] sm:$0xf]
    %v89 = vld [vmem:[%s0 + $0x5c] sm:$0xf]
    %v90 = vld [vmem:[%s0 + $0x60] sm:$0xf]
    %v91 = vld [vmem:[%s0 + $0x64] sm:$0xf]
    %v92 = vld [vmem:[%s0 + $0x68] sm:$0xf]
    %v93 = vld [vmem:[%s0 + $0x6c] sm:$0xf]
    %v94 = vld [vmem:[%s0 + $0x70] sm:$0xf]
    %v95 = vld [vmem:[%s0 + $0x74] sm:$0xf]
    %v96 = vld [vmem:[%s0 + $0x78] sm:$0xf]
    %v97 = vld [vmem:[%s0 + $0x7c] sm:$0xf]
    %v98 = vld [vmem:[%s1] sm:$0x1]
    %v100 = vperm.slane %v98, 0
    %v104 = vunpack.c.l.b16 %v64
    %v105 = vunpack.c.h.b16 %v64
    %v106 = vunpack.c.l.b16 %v65
    %v107 = vunpack.c.h.b16 %v65
    %v108 = vpack.c.b16 %v106, %v104
    %v109 = vpack.c.b16 %v107, %v105
    %v144 = vunpack.c.l.b16 %v66
    %v145 = vunpack.c.l.b16 %v67
    %v146 = vunpack.c.l.b16 %v68
    %v147 = vunpack.c.l.b16 %v69
    %v148 = vunpack.c.l.b16 %v70
    %v149 = vunpack.c.l.b16 %v71
    %v150 = vunpack.c.l.b16 %v72
    %v151 = vunpack.c.l.b16 %v73
    %v152 = vunpack.c.l.b16 %v74
    %v153 = vunpack.c.l.b16 %v75
    %v154 = vunpack.c.l.b16 %v76
    %v155 = vunpack.c.l.b16 %v77
    %v156 = vunpack.c.l.b16 %v78
    %v157 = vunpack.c.l.b16 %v79
    %v158 = vunpack.c.l.b16 %v80
    %v159 = vunpack.c.l.b16 %v81
    %v160 = vunpack.c.l.b16 %v82
    %v161 = vunpack.c.l.b16 %v83
    %v162 = vunpack.c.l.b16 %v84
    %v163 = vunpack.c.l.b16 %v85
    %v164 = vunpack.c.l.b16 %v86
    %v165 = vunpack.c.l.b16 %v87
    %v166 = vunpack.c.l.b16 %v88
    %v167 = vunpack.c.l.b16 %v89
    %v168 = vunpack.c.l.b16 %v90
    %v169 = vunpack.c.l.b16 %v91
    %v170 = vunpack.c.l.b16 %v92
    %v171 = vunpack.c.l.b16 %v93
    %v172 = vunpack.c.l.b16 %v94
    %v173 = vunpack.c.l.b16 %v95
    %v174 = vunpack.c.l.b16 %v96
    %v175 = vunpack.c.l.b16 %v97
    %v176 = vpack.c.b16 %v145, %v144
    %v177 = vpack.c.b16 %v147, %v146
    %v178 = vpack.c.b16 %v149, %v148
    %v179 = vpack.c.b16 %v151, %v150
    %v180 = vpack.c.b16 %v153, %v152
    %v181 = vpack.c.b16 %v155, %v154
    %v182 = vpack.c.b16 %v157, %v156
    %v183 = vpack.c.b16 %v159, %v158
    %v184 = vpack.c.b16 %v161, %v160
    %v185 = vpack.c.b16 %v163, %v162
    %v186 = vpack.c.b16 %v165, %v164
    %v187 = vpack.c.b16 %v167, %v166
    %v188 = vpack.c.b16 %v169, %v168
    %v189 = vpack.c.b16 %v171, %v170
    %v190 = vpack.c.b16 %v173, %v172
    %v191 = vpack.c.b16 %v175, %v174
    %208 = vmatpush.bf16.msra.mxu0 %v183
    %209 = vmatpush.bf16.msra.mxu0 %v182
    %210 = vmatpush.bf16.msra.mxu0 %v181
    %211 = vmatpush.bf16.msra.mxu0 %v180
    %212 = vmatpush.bf16.msra.mxu0 %v179
    %213 = vmatpush.bf16.msra.mxu0 %v178
    %214 = vmatpush.bf16.msra.mxu0 %v177
    %215 = vmatpush.bf16.msra.mxu0 %v176
    %216 = vmatmul.bf16.gmra.mxu0 %v108
    %v217 = vpop.f32.mrf.mxu0
    %v218 = vadd.f32 %v100, %v217
    %v219 = vpop.f32.mrf.mxu0
    %v220 = vadd.f32 %v100, %v219
    %221 = vdwg.mxu0
    %222 = vmatpush.bf16.msra.mxu0 %v191
    %223 = vmatpush.bf16.msra.mxu0 %v190
    %224 = vmatpush.bf16.msra.mxu0 %v189
    %225 = vmatpush.bf16.msra.mxu0 %v188
    %226 = vmatpush.bf16.msra.mxu0 %v187
    %227 = vmatpush.bf16.msra.mxu0 %v186
    %228 = vmatpush.bf16.msra.mxu0 %v185
    %229 = vmatpush.bf16.msra.mxu0 %v184
    %230 = vmatmul.bf16.gmra.mxu0 %v109
    %v231 = vpop.f32.mrf.mxu0
    %v232 = vadd.f32 %v218, %v231
    %v233 = vpop.f32.mrf.mxu0
    %v234 = vadd.f32 %v220, %v233
    %235 = vdwg.mxu0
    %236 = vst [vmem:[%s4] sm:$0xff] %v232
    %237 = vst [vmem:[%s4 + $0x8] sm:$0xff] %v234
    // Predicated region
    $region14: #{patch_embedding_forward.2} parent=1 // pred_check
      _
    $region15: #{patch_embedding_forward.2} parent=1 // pred_check_branch
      %239 = sbr.rel (0) target = $region17
    $region16: #{patch_embedding_forward.2} parent=1 // pred_region
      _
    $region17: #{patch_embedding_forward.2} parent=1 // pred_fallthru
      _
    // Predicated region
    $region18: #{patch_embedding_forward.2} parent=1 // pred_check
      _
    $region19: #{patch_embedding_forward.2} parent=1 // pred_check_branch
      %241 = sbr.rel (0) target = $region21
    $region20: #{patch_embedding_forward.2} parent=1 // pred_region
      _
    $region21: #{patch_embedding_forward.2} parent=1 // pred_fallthru
      _

</llo_original>
